<compile_context>
chip_gen: v6e
topology: v6e:2x2x1
jax: 0.10.0
libtpu: 0.0.40
codegen_flags: <defaults>
</compile_context>

<pallas_src>
import functools

import jax
import jax.numpy as jnp
from jax.experimental import pallas as pl
from jax.experimental.pallas import tpu as pltpu


# ---------------------------------------------------------------------------
# Fused Pallas kernel
# ---------------------------------------------------------------------------

def _brio_fused_kernel(h_ref, w_ref, tgt_ref, tok_ref, logits_ref,
                       *, use_softmax):
    """Score one block of `blk` flattened candidate positions.

    h_ref      : (blk, H)  bf16   hidden states (candidate-0 rows come first).
    w_ref      : (H, V)    bf16   vocab projection (constant block index).
    tgt_ref    : (1, blk)  int32  lane-dense shifted target ids.
    tok_ref    : (1, blk)  f32    lane-dense (log-)prob of the target token.
    logits_ref : (blk, V)  f32    pinned block (0,0); written only at step 0
                                  (candidate-0 / `probs` rows are its head).
    """
    logits = jnp.dot(h_ref[...], w_ref[...],
                     preferred_element_type=jnp.float32)           # (blk, V) f32

    # Full-width logits are only ever read back for candidate 0 (`probs`);
    # every other grid step skips the dominant (blk, V) HBM writeback.
    @pl.when(pl.program_id(0) == 0)
    def _():
        logits_ref[...] = logits

    # Lane-dense target row -> (blk, 1) column (one cheap 32-bit XLU op).
    tgt_col = jnp.transpose(tgt_ref[...], (1, 0))                  # (blk, 1) i32

    m = jnp.max(logits, axis=-1, keepdims=True)                    # (blk, 1)
    e = jnp.exp(logits - m)                                        # (blk, V)
    s = jnp.sum(e, axis=-1, keepdims=True)                         # (blk, 1)
    lane = jax.lax.broadcasted_iota(jnp.int32, logits.shape, 1)    # (blk, V)
    hit = lane == tgt_col                                          # (blk, V)

    if use_softmax:
        # Gather from the already-computed exp() and put the divide on the
        # EUP slot (approx reciprocal) — free relative to the reductions.
        tok_col = (jnp.sum(jnp.where(hit, e, 0.0), axis=-1, keepdims=True)
                   * pl.reciprocal(s, approx=True))
    else:
        # log_softmax: gather the *raw* logit (never through exp() — underflow
        # for very negative target logits would otherwise give -inf).
        tok_logit = jnp.sum(jnp.where(hit, logits, 0.0), axis=-1, keepdims=True)
        tok_col = (tok_logit - m) - jnp.log(s)

    # (blk, 1) column -> (1, blk) lane-dense row: one unmasked full-width
    # store + a dense HBM DMA instead of blk masked / strided element stores.
    tok_ref[...] = jnp.transpose(tok_col, (1, 0))


# ---------------------------------------------------------------------------
# pallas_call wrapper
# ---------------------------------------------------------------------------

def _round_up(x, m):
    return ((x + m - 1) // m) * m


def brio_score_pallas(hidden, w_out, tgt, *, gold_rows, use_softmax,
                      block_rows=512):
    """Score all flattened candidate positions in ONE pallas_call.

    hidden : (rows, H) bf16, rows ordered candidate-0-first.
    w_out  : (H, V)    bf16.
    tgt    : (rows,)   int32 shifted target ids (same row order).
    Returns (tok, logits0):
      tok     : (rows,) f32 per-position (log-)softmax target probabilities.
      logits0 : (gold_rows, V) f32 full logits of the candidate-0 rows.
    """
    rows, H = hidden.shape
    V = w_out.shape[1]

    # Row tile: lane-dense (multiple of 128), ~512 rows per step, and big
    # enough that all candidate-0 (gold) rows land in grid step 0.
    blk = min(block_rows, _round_up(rows, 128))
    blk = max(blk, _round_up(gold_rows, 128), 128)
    rows_p = _round_up(rows, blk)
    nblk = rows_p // blk

    pad_r = rows_p - rows
    if pad_r:
        hidden = jnp.concatenate(
            [hidden, jnp.zeros((pad_r, H), hidden.dtype)], axis=0)
        tgt = jnp.concatenate(
            [tgt, jnp.zeros((pad_r,), tgt.dtype)], axis=0)
    tgt2d = tgt.reshape(nblk, blk)                     # lane-dense int32 rows

    kernel = functools.partial(_brio_fused_kernel, use_softmax=use_softmax)

    # NOTE: the projection's block index never changes, so it is only DMA'd
    # once; pipeline_mode=pl.Buffered(1) would additionally drop its second
    # VMEM buffer, but at (H, V) = (32, 128) bf16 that is 8 KiB and not worth
    # relying on backend pipeline_mode support.
    tok, logits0 = pl.pallas_call(
        kernel,
        grid_spec=pltpu.PrefetchScalarGridSpec(
            num_scalar_prefetch=0,
            grid=(nblk,),
            in_specs=[
                pl.BlockSpec((blk, H), lambda i: (i, 0)),   # hidden rows (bf16)
                pl.BlockSpec((H, V), lambda i: (0, 0)),     # projection, resident
                pl.BlockSpec((1, blk), lambda i: (i, 0)),   # lane-dense targets
            ],
            out_specs=(
                pl.BlockSpec((1, blk), lambda i: (i, 0)),   # lane-dense tok scores
                pl.BlockSpec((blk, V), lambda i: (0, 0)),   # gold logits, pinned
            ),
        ),
        out_shape=(
            jax.ShapeDtypeStruct((nblk, blk), jnp.float32),
            jax.ShapeDtypeStruct((blk, V), jnp.float32),
        ),
        # Pinned logits block stays resident across the grid -> this axis must
        # be "arbitrary" (fusing everything into one launch / one pass over W
        # outweighs v7x two-core sharding at these shapes).
        compiler_params=pltpu.CompilerParams(
            dimension_semantics=("arbitrary",)),
    )(hidden, w_out, tgt2d)

    return tok.reshape(rows_p)[:rows], logits0[:gold_rows]


# ---------------------------------------------------------------------------
# Model wrapper (mirrors BRIO.forward's candidate-scoring semantics)
# ---------------------------------------------------------------------------

class BRIOPallas:
    """JAX/Pallas re-implementation of BRIO.forward's candidate scoring."""

    def __init__(self, pad_token_id, vocab=128, hidden=32, seed=0):
        self.pad_token_id = int(pad_token_id)
        self.vocab = vocab
        self.hidden = hidden
        k1, k2 = jax.random.split(jax.random.PRNGKey(seed))
        # Deterministic synthetic "decoder" parameters, stored bf16 once so the
        # embedding gather / matmul inputs need no per-forward recast.
        self.embed = (0.1 * jax.random.normal(k1, (vocab, hidden),
                                              jnp.float32)).astype(jnp.bfloat16)
        self.w_out = (0.1 * jax.random.normal(k2, (hidden, vocab),
                                              jnp.float32)).astype(jnp.bfloat16)

    def forward(self, article_id, candidate_id, *, length_penalty=2.0,
                use_softmax=False, require_gold=True):
        del article_id  # synthetic decoder conditions only on candidate tokens
        B, C, L = candidate_id.shape
        V = self.vocab
        pad = self.pad_token_id

        cid = candidate_id.astype(jnp.int32)

        # Shifted targets: target for position t is token t+1; the last
        # position is pad-filled and masked out of every reduction below.
        tgt = jnp.concatenate(
            [cid[:, :, 1:], jnp.full((B, C, 1), pad, jnp.int32)], axis=-1)

        # Candidate-0-first row order so the gold rows fill grid block 0.
        cid_cf = jnp.transpose(cid, (1, 0, 2)).reshape(C * B * L)
        tgt_cf = jnp.transpose(tgt, (1, 0, 2)).reshape(C * B * L)

        hidden = jnp.take(self.embed, cid_cf, axis=0)          # (rows, H) bf16

        tok_flat, logits0 = brio_score_pallas(
            hidden, self.w_out, tgt_cf,
            gold_rows=B * L, use_softmax=use_softmax)

        tok = tok_flat.reshape(C, B, L).transpose(1, 0, 2)     # (B, C, L)
        probs = logits0.reshape(B, L, V)                       # candidate-0 logits

        token_level_scores = tok[:, :, : L - 1]                # (B, C, L-1)

        # Masked, length-penalised sequence scores (tiny JAX epilogue).
        cand_mask = (cid[:, :, 1:] != pad).astype(jnp.float32) # (B, C, L-1)
        div_num = cand_mask.sum(-1) ** float(length_penalty)
        scores = (token_level_scores * cand_mask).sum(-1) / div_num

        if require_gold:
            return {"score": scores[:, 1:], "summary_score": scores[:, 0],
                    "probs": probs, "token_level_scores": token_level_scores,
                    "div_num": div_num}
        return {"score": scores, "probs": probs,
                "token_level_scores": token_level_scores, "div_num": div_num}


# ---------------------------------------------------------------------------
# Pure-jnp reference (same synthetic decoder, same bf16 matmul inputs)
# ---------------------------------------------------------------------------

def _reference_forward(model, candidate_id, length_penalty, use_softmax):
    B, C, L = candidate_id.shape
    cid = candidate_id.reshape(B * C, L).astype(jnp.int32)
    hidden = jnp.take(model.embed, cid, axis=0)                 # bf16
    logits = jnp.einsum("blh,hv->blv", hidden, model.w_out,
                        preferred_element_type=jnp.float32)
    logits = logits.reshape(B, C, L, -1)
    out = logits[:, :, :-1]
    tgt = candidate_id[:, :, 1:].astype(jnp.int32)
    mask = (tgt != model.pad_token_id).astype(jnp.float32)
    if use_softmax:
        dist = jax.nn.softmax(out, axis=3)
    else:
        dist = jax.nn.log_softmax(out, axis=3)
    tok = jnp.take_along_axis(dist, tgt[..., None], axis=3).squeeze(-1)
    div = mask.sum(-1) ** length_penalty
    sc = (tok * mask).sum(-1) / div
    return logits[:, 0], tok, sc, div


if __name__ == "__main__":
    B, C, L = 2, 3, 8          # batch, candidates (gold + 2), decoder length
    VOCAB, HID = 128, 32
    PAD = 0
    LENGTH_PENALTY = 2.0

    key = jax.random.PRNGKey(0)
    k_art, k_cand = jax.random.split(key)
    article_id = jax.random.randint(k_art, (B, 16), 1, VOCAB, dtype=jnp.int32)
    candidate_id = jax.random.randint(k_cand, (B, C, L), 1, VOCAB, dtype=jnp.int32)
    candidate_id = candidate_id.at[:, :, -1].set(PAD)   # give every seq padding

    model = BRIOPallas(pad_token_id=PAD, vocab=VOCAB, hidden=HID, seed=0)

    # log-softmax path (args.softmax == False)
    out = model.forward(article_id, candidate_id,
                        length_penalty=LENGTH_PENALTY, use_softmax=False,
                        require_gold=True)
    jax.block_until_ready(out)

    probs_r, tok_r, sc_r, div_r = _reference_forward(
        model, candidate_id, LENGTH_PENALTY, use_softmax=False)
    assert jnp.allclose(out["probs"], probs_r, atol=1e-3)
    assert jnp.allclose(out["token_level_scores"], tok_r, atol=1e-3)
    assert jnp.allclose(out["summary_score"], sc_r[:, 0], atol=1e-3)
    assert jnp.allclose(out["score"], sc_r[:, 1:], atol=1e-3)
    assert jnp.allclose(out["div_num"], div_r, atol=1e-4)

    # softmax path (args.softmax == True), require_gold=False
    out_sm = model.forward(article_id, candidate_id,
                           length_penalty=LENGTH_PENALTY, use_softmax=True,
                           require_gold=False)
    jax.block_until_ready(out_sm)
    _, tok_s, sc_s, _ = _reference_forward(
        model, candidate_id, LENGTH_PENALTY, use_softmax=True)
    assert jnp.allclose(out_sm["token_level_scores"], tok_s, atol=1e-3)
    assert jnp.allclose(out_sm["score"], sc_s, atol=1e-3)

    print("KERNEL_OK")
</pallas_src>

<mosaic_0001>
module attributes {stable_mosaic.version = 11 : i64} {
  func.func @_brio_fused_kernel(%arg0: i32, %arg1: memref<128x32xbf16, #tpu.memory_space<vmem>>, %arg2: memref<32x128xbf16, #tpu.memory_space<vmem>>, %arg3: memref<1x128xi32, #tpu.memory_space<vmem>>, %arg4: memref<1x128xf32, #tpu.memory_space<vmem>>, %arg5: memref<128x128xf32, #tpu.memory_space<vmem>>) attributes {dimension_semantics = [#tpu.dimension_semantics<arbitrary>], iteration_bounds = array<i64: 1>, scalar_prefetch = 0 : i64, scratch_operands = 0 : i64, tpu.core_type = #tpu.core_type<tc>, window_params = [{transform_indices = @transform_0, window_bounds = array<i64: 128, 32>}, {pipeline_mode = #tpu.pipeline_mode<synchronous>, transform_indices = @transform_1, window_bounds = array<i64: 32, 128>}, {transform_indices = @transform_2, window_bounds = array<i64: 1, 128>}, {transform_indices = @transform_3, window_bounds = array<i64: 1, 128>}, {pipeline_mode = #tpu.pipeline_mode<synchronous>, transform_indices = @transform_4, window_bounds = array<i64: 128, 128>}]} {
    %c0 = arith.constant 0 : index
    %c0_0 = arith.constant 0 : index
    %0 = vector.load %arg1[%c0, %c0_0] : memref<128x32xbf16, #tpu.memory_space<vmem>>, vector<128x32xbf16>
    %c0_1 = arith.constant 0 : index
    %c0_2 = arith.constant 0 : index
    %1 = vector.load %arg2[%c0_1, %c0_2] : memref<32x128xbf16, #tpu.memory_space<vmem>>, vector<32x128xbf16>
    %cst = arith.constant dense<0.000000e+00> : vector<128x128xf32>
    %2 = tpu.matmul %0, %1, %cst {dimension_numbers = #tpu.dot_dimension_numbers<[1], [0], [0], [1], [0, 0, 1, 1], [], []>} : vector<128x32xbf16>, vector<32x128xbf16>, vector<128x128xf32> -> vector<128x128xf32>
    %c0_i32 = arith.constant 0 : i32
    %3 = arith.cmpi eq, %arg0, %c0_i32 : i32
    %4 = arith.extui %3 : i1 to i32
    %c0_i32_3 = arith.constant 0 : i32
    %5 = arith.cmpi ne, %4, %c0_i32_3 : i32
    scf.if %5 {
      %c0_12 = arith.constant 0 : index
      %c0_13 = arith.constant 0 : index
      %27 = vector.load %arg5[%c0_12, %c0_13] : memref<128x128xf32, #tpu.memory_space<vmem>>, vector<128x128xf32>
      tpu.vector_store %arg5[%c0_12, %c0_13], %2 {strides = array<i32>} : memref<128x128xf32, #tpu.memory_space<vmem>>, vector<128x128xf32>,
    } else {
    }
    %c0_4 = arith.constant 0 : index
    %c0_5 = arith.constant 0 : index
    %6 = vector.load %arg3[%c0_4, %c0_5] : memref<1x128xi32, #tpu.memory_space<vmem>>, vector<1x128xi32>
    %7 = tpu.transpose %6, [1, 0] : vector<1x128xi32> -> vector<128x1xi32>
    %cst_6 = arith.constant dense<0xFF800000> : vector<128xf32>
    %8 = vector.multi_reduction <maximumf>, %2, %cst_6 [1] : vector<128x128xf32> to vector<128xf32>
    %9 = vector.shape_cast %8 : vector<128xf32> to vector<128x1xf32>
    %10 = vector.broadcast %9 : vector<128x1xf32> to vector<128x128xf32>
    %11 = arith.subf %2, %10 : vector<128x128xf32>
    %12 = math.exp %11 : vector<128x128xf32>
    %cst_7 = arith.constant dense<0.000000e+00> : vector<128xf32>
    %13 = vector.multi_reduction <add>, %12, %cst_7 [1] : vector<128x128xf32> to vector<128xf32>
    %14 = vector.shape_cast %13 : vector<128xf32> to vector<128x1xf32>
    %15 = tpu.iota {dimensions = array<i32: 1>} : vector<128x128xi32>
    %16 = vector.broadcast %7 : vector<128x1xi32> to vector<128x128xi32>
    %17 = arith.cmpi eq, %15, %16 : vector<128x128xi32>
    %cst_8 = arith.constant 0.000000e+00 : f32
    %18 = vector.broadcast %cst_8 : f32 to vector<128x128xf32>
    %19 = arith.select %17, %2, %18 : vector<128x128xi1>, vector<128x128xf32>
    %cst_9 = arith.constant dense<0.000000e+00> : vector<128xf32>
    %20 = vector.multi_reduction <add>, %19, %cst_9 [1] : vector<128x128xf32> to vector<128xf32>
    %21 = vector.shape_cast %20 : vector<128xf32> to vector<128x1xf32>
    %22 = arith.subf %21, %9 : vector<128x1xf32>
    %23 = math.log %14 : vector<128x1xf32>
    %24 = arith.subf %22, %23 : vector<128x1xf32>
    %25 = tpu.transpose %24, [1, 0] : vector<128x1xf32> -> vector<1x128xf32>
    %c0_10 = arith.constant 0 : index
    %c0_11 = arith.constant 0 : index
    %26 = vector.load %arg4[%c0_10, %c0_11] : memref<1x128xf32, #tpu.memory_space<vmem>>, vector<1x128xf32>
    tpu.vector_store %arg4[%c0_10, %c0_11], %25 {strides = array<i32>} : memref<1x128xf32, #tpu.memory_space<vmem>>, vector<1x128xf32>,
    return
  }
  func.func @transform_0(%arg0: i32) -> (i32, i32) {
    %c0_i32 = arith.constant 0 : i32
    %c0_i32_0 = arith.constant 0 : i32
    return %arg0, %c0_i32 : i32, i32
  }
  func.func @transform_1(%arg0: i32) -> (i32, i32) {
    %c0_i32 = arith.constant 0 : i32
    %c0_i32_0 = arith.constant 0 : i32
    %c0_i32_1 = arith.constant 0 : i32
    return %c0_i32, %c0_i32_0 : i32, i32
  }
  func.func @transform_2(%arg0: i32) -> (i32, i32) {
    %c0_i32 = arith.constant 0 : i32
    %c0_i32_0 = arith.constant 0 : i32
    return %arg0, %c0_i32 : i32, i32
  }
  func.func @transform_3(%arg0: i32) -> (i32, i32) {
    %c0_i32 = arith.constant 0 : i32
    %c0_i32_0 = arith.constant 0 : i32
    return %arg0, %c0_i32 : i32, i32
  }
  func.func @transform_4(%arg0: i32) -> (i32, i32) {
    %c0_i32 = arith.constant 0 : i32
    %c0_i32_0 = arith.constant 0 : i32
    %c0_i32_1 = arith.constant 0 : i32
    return %c0_i32, %c0_i32_0 : i32, i32
  }
}

</mosaic_0001>

<llo_original>
// kernel: tpu_custom_call.1
$region0: #{tpu_custom_call.1}
  #allocation0 [shape = 'u32[]', space=smem, size = 0x4, offset = 0x4, fixed_abs, tag = 'smem constant byte address 0x4 - core index']
  #allocation1 [shape = 'u32[144,128]{1,0:T(1,128)}', space=vmem, size = 0x12000, scoped, tag = 'internal scratch']
  %s0 = inlined_call_operand.vmem [shape: bf16[128,32], index: 0, kind: input, shape index: {}]
  %s1 = inlined_call_operand.vmem [shape: bf16[32,128], index: 1, kind: input, shape index: {}]
  %s2 = inlined_call_operand.vmem [shape: s32[1,128], index: 2, kind: input, shape index: {}]
  %s3 = inlined_call_operand.hbm [shape: f32[1,128], index: 3, kind: output, shape index: {0}]
  %s4 = inlined_call_operand.hbm [shape: f32[128,128], index: 4, kind: output, shape index: {1}]
  %5 = xla_tuple %s3, %s4
  %s6 = sld [smem:[#allocation0]]
  $region34: #{tpu_custom_call.1} parent=0
    _
  %s8 = ssub.s32 1, %s6
  %s9 = scalar_select 0, %s8, %s6
  $region1: #{tpu_custom_call.1} parent=0
    #allocation2 [shape = 'u8[512]{0}', space=vmem, size = 0x400, scoped, tag = 'output window, operand 0, single buffered']
    #allocation3 [shape = 's32[1]{0}', space=sflag, size = 0x4, scoped, tag = 'scoped memory for tpu_custom_call.1']
    #allocation4 [shape = 'u8[65536]{0}', space=vmem, size = 0x10000, scoped, tag = 'output window, operand 1, single buffered']
    #allocation5 [shape = 's32[1]{0}', space=sflag, size = 0x4, scoped, tag = 'scoped memory for tpu_custom_call.1']
    %10 = vsyncpa [#allocation3], 0
    %11 = vsyncpa [#allocation5], 0
    // Predicated region
    $region2: #{tpu_custom_call.1} parent=1 // pred_check
      _
    $region3: #{tpu_custom_call.1} parent=1 // pred_check_branch
      %13 = sbr.rel (0) target = $region5
    $region4: #{tpu_custom_call.1} parent=1 // pred_region
      _
    $region5: #{tpu_custom_call.1} parent=1 // pred_fallthru
      _
    // Predicated region
    $region6: #{tpu_custom_call.1} parent=1 // pred_check
      _
    $region7: #{tpu_custom_call.1} parent=1 // pred_check_branch
      %15 = sbr.rel (0) target = $region9
    $region8: #{tpu_custom_call.1} parent=1 // pred_region
      _
    $region9: #{tpu_custom_call.1} parent=1 // pred_fallthru
      _
    // Predicated region
    $region10: #{tpu_custom_call.1} parent=1 // pred_check
      _
    $region11: #{tpu_custom_call.1} parent=1 // pred_check_branch
      %17 = sbr.rel (0) target = $region13
    $region12: #{tpu_custom_call.1} parent=1 // pred_region
      _
    $region13: #{tpu_custom_call.1} parent=1 // pred_fallthru
      _
    %v19 = vld [vmem:[%s0] sm:$0xf]
    %v20 = vld [vmem:[%s0 + $0x4] sm:$0xf]
    %v21 = vld [vmem:[%s0 + $0x8] sm:$0xf]
    %v22 = vld [vmem:[%s0 + $0xc] sm:$0xf]
    %v23 = vld [vmem:[%s0 + $0x10] sm:$0xf]
    %v24 = vld [vmem:[%s0 + $0x14] sm:$0xf]
    %v25 = vld [vmem:[%s0 + $0x18] sm:$0xf]
    %v26 = vld [vmem:[%s0 + $0x1c] sm:$0xf]
    %v27 = vld [vmem:[%s0 + $0x20] sm:$0xf]
    %v28 = vld [vmem:[%s0 + $0x24] sm:$0xf]
    %v29 = vld [vmem:[%s0 + $0x28] sm:$0xf]
    %v30 = vld [vmem:[%s0 + $0x2c] sm:$0xf]
    %v31 = vld [vmem:[%s0 + $0x30] sm:$0xf]
    %v32 = vld [vmem:[%s0 + $0x34] sm:$0xf]
    %v33 = vld [vmem:[%s0 + $0x38] sm:$0xf]
    %v34 = vld [vmem:[%s0 + $0x3c] sm:$0xf]
    %v35 = vld [vmem:[%s1] sm:$0xf]
    %v36 = vld [vmem:[%s1 + $0x4] sm:$0xf]
    %v37 = vld [vmem:[%s1 + $0x8] sm:$0xf]
    %v38 = vld [vmem:[%s1 + $0xc] sm:$0xf]
    %v55 = vunpack.c.l.b16 %v19
    %v56 = vunpack.c.l.b16 %v20
    %v57 = vunpack.c.l.b16 %v21
    %v58 = vunpack.c.l.b16 %v22
    %v59 = vunpack.c.l.b16 %v23
    %v60 = vunpack.c.l.b16 %v24
    %v61 = vunpack.c.l.b16 %v25
    %v62 = vunpack.c.l.b16 %v26
    %v63 = vunpack.c.l.b16 %v27
    %v64 = vunpack.c.l.b16 %v28
    %v65 = vunpack.c.l.b16 %v29
    %v66 = vunpack.c.l.b16 %v30
    %v67 = vunpack.c.l.b16 %v31
    %v68 = vunpack.c.l.b16 %v32
    %v69 = vunpack.c.l.b16 %v33
    %v70 = vunpack.c.l.b16 %v34
    %v71 = vpack.c.b16 %v56, %v55
    %v72 = vpack.c.b16 %v58, %v57
    %v73 = vpack.c.b16 %v60, %v59
    %v74 = vpack.c.b16 %v62, %v61
    %v75 = vpack.c.b16 %v64, %v63
    %v76 = vpack.c.b16 %v66, %v65
    %v77 = vpack.c.b16 %v68, %v67
    %v78 = vpack.c.b16 %v70, %v69
    %v83 = vunpack.c.l.b16 %v35
    %v84 = vunpack.c.l.b16 %v36
    %v85 = vunpack.c.l.b16 %v37
    %v86 = vunpack.c.l.b16 %v38
    %v87 = vpack.c.b16 %v84, %v83
    %v88 = vpack.c.b16 %v86, %v85
    %vm91 = vcmask 261120
    %v93 = vsel %vm91, %v71, 0
    %v96 = vsel %vm91, %v72, 0
    %v99 = vsel %vm91, %v73, 0
    %v102 = vsel %vm91, %v74, 0
    %v105 = vsel %vm91, %v75, 0
    %v108 = vsel %vm91, %v76, 0
    %v111 = vsel %vm91, %v77, 0
    %v114 = vsel %vm91, %v78, 0
    %116 = vmatprep.subr.bf16.mxu0 0
    %117 = vmatpush1.bf16.msra.mxu0 0
    %118 = vmatprep.subr.bf16.mxu0 0
    %119 = vmatpush1.bf16.msra.mxu0 0
    %120 = vmatprep.subr.bf16.mxu0 0
    %121 = vmatpush1.bf16.msra.mxu0 0
    %122 = vmatprep.subr.bf16.mxu0 0
    %123 = vmatpush1.bf16.msra.mxu0 0
    %124 = vmatprep.subr.bf16.mxu0 0
    %125 = vmatpush1.bf16.msra.mxu0 0
    %126 = vmatprep.subr.bf16.mxu0 0
    %127 = vmatpush1.bf16.msra.mxu0 0
    %128 = vmatprep.subr.bf16.mxu0 0
    %129 = vmatpush1.bf16.msra.mxu0 %v88
    %130 = vmatprep.subr.bf16.mxu0 0
    %131 = vmatpush1.bf16.msra.mxu0 %v87
    %132 = vmatprep.subr.bf16.mxu0 0
    %133 = vmatpush2.bf16.msra.mxu0 0
    %134 = vmatprep.subr.bf16.mxu0 0
    %135 = vmatpush2.bf16.msra.mxu0 0
    %136 = vmatprep.subr.bf16.mxu0 0
    %137 = vmatpush2.bf16.msra.mxu0 0
    %138 = vmatprep.subr.bf16.mxu0 0
    %139 = vmatpush2.bf16.msra.mxu0 0
    %140 = vmatprep.subr.bf16.mxu0 0
    %141 = vmatpush2.bf16.msra.mxu0 0
    %142 = vmatprep.subr.bf16.mxu0 0
    %143 = vmatpush2.bf16.msra.mxu0 0
    %144 = vmatprep.subr.bf16.mxu0 0
    %145 = vmatpush2.bf16.msra.mxu0 0
    %146 = vmatprep.subr.bf16.mxu0 0
    %147 = vmatpush2.bf16.msra.mxu0 0
    %148 = vmatprep.mubr.bf16.mxu0 0
    %149 = vmatmul.mubr.bf16.gmra.mxu0 %v93
    %v150 = vpop.f32.mrf.mxu0
    %v151 = vadd.f32 0.0, %v150
    %v152 = vpop.f32.mrf.mxu0
    %v153 = vpop.f32.mrf.mxu0
    %v154 = vadd.f32 0.0, %v153
    %v155 = vpop.f32.mrf.mxu0
    %156 = vmatprep.mubr.bf16.mxu0 0
    %157 = vmatmul.mubr.bf16.gmra.mxu0 %v96
    %v158 = vpop.f32.mrf.mxu0
    %v159 = vadd.f32 0.0, %v158
    %v160 = vpop.f32.mrf.mxu0
    %v161 = vpop.f32.mrf.mxu0
    %v162 = vadd.f32 0.0, %v161
    %v163 = vpop.f32.mrf.mxu0
    %164 = vmatprep.mubr.bf16.mxu0 0
    %165 = vmatmul.mubr.bf16.gmra.mxu0 %v99
    %v166 = vpop.f32.mrf.mxu0
    %v167 = vadd.f32 0.0, %v166
    %v168 = vpop.f32.mrf.mxu0
    %v169 = vpop.f32.mrf.mxu0
    %v170 = vadd.f32 0.0, %v169
    %v171 = vpop.f32.mrf.mxu0
    %172 = vmatprep.mubr.bf16.mxu0 0
    %173 = vmatmul.mubr.bf16.gmra.mxu0 %v102
    %v174 = vpop.f32.mrf.mxu0
    %v175 = vadd.f32 0.0, %v174
    %v176 = vpop.f32.mrf.mxu0
    %v177 = vpop.f32.mrf.mxu0
    %v178 = vadd.f32 0.0, %v177
    %v179 = vpop.f32.mrf.mxu0
    %180 = vmatprep.mubr.bf16.mxu0 0
    %181 = vmatmul.mubr.bf16.gmra.mxu0 %v105
    %v182 = vpop.f32.mrf.mxu0
    %v183 = vadd.f32 0.0, %v182
    %v184 = vpop.f32.mrf.mxu0
    %v185 = vpop.f32.mrf.mxu0
    %v186 = vadd.f32 0.0, %v185
    %v187 = vpop.f32.mrf.mxu0
    %188 = vmatprep.mubr.bf16.mxu0 0
    %189 = vmatmul.mubr.bf16.gmra.mxu0 %v108
    %v190 = vpop.f32.mrf.mxu0
    %v191 = vadd.f32 0.0, %v190
    %v192 = vpop.f32.mrf.mxu0
    %v193 = vpop.f32.mrf.mxu0
    %v194 = vadd.f32 0.0, %v193
    %v195 = vpop.f32.mrf.mxu0
    %196 = vmatprep.mubr.bf16.mxu0 0
    %197 = vmatmul.mubr.bf16.gmra.mxu0 %v111
    %v198 = vpop.f32.mrf.mxu0
    %v199 = vadd.f32 0.0, %v198
    %v200 = vpop.f32.mrf.mxu0
    %v201 = vpop.f32.mrf.mxu0
    %v202 = vadd.f32 0.0, %v201
    %v203 = vpop.f32.mrf.mxu0
    %204 = vmatprep.mubr.bf16.mxu0 0
    %205 = vmatmul.mubr.bf16.gmra.mxu0 %v114
    %v206 = vpop.f32.mrf.mxu0
    %v207 = vadd.f32 0.0, %v206
    %v208 = vpop.f32.mrf.mxu0
    %v209 = vpop.f32.mrf.mxu0
    %v210 = vadd.f32 0.0, %v209
    %v211 = vpop.f32.mrf.mxu0
    %212 = vdwg.mxu0
    %p213 = scmp.eq.s32.totalorder 0, 0
    // Predicated region
    $region14: #{tpu_custom_call.1} parent=1 // pred_check
      %p214 = pneg %p213
    $region15: #{tpu_custom_call.1} parent=1 // pred_check_branch
      %216 = sbr.rel (%p214) target = $region17
    $region16: #{tpu_custom_call.1} parent=1 // pred_region
      %217 = vst [vmem:[#allocation4] sm:$0xff] %v151
      %218 = vst [vmem:[#allocation4 + $0x8] sm:$0xff] %v154
      %219 = vst [vmem:[#allocation4 + $0x10] sm:$0xff] %v159
      %220 = vst [vmem:[#allocation4 + $0x18] sm:$0xff] %v162
      %221 = vst [vmem:[#allocation4 + $0x20] sm:$0xff] %v167
      %222 = vst [vmem:[#allocation4 + $0x28] sm:$0xff] %v170
      %223 = vst [vmem:[#allocation4 + $0x30] sm:$0xff] %v175
      %224 = vst [vmem:[#allocation4 + $0x38] sm:$0xff] %v178
      %225 = vst [vmem:[#allocation4 + $0x40] sm:$0xff] %v183
      %226 = vst [vmem:[#allocation4 + $0x48] sm:$0xff] %v186
      %227 = vst [vmem:[#allocation4 + $0x50] sm:$0xff] %v191
      %228 = vst [vmem:[#allocation4 + $0x58] sm:$0xff] %v194
      %229 = vst [vmem:[#allocation4 + $0x60] sm:$0xff] %v199
      %230 = vst [vmem:[#allocation4 + $0x68] sm:$0xff] %v202
      %231 = vst [vmem:[#allocation4 + $0x70] sm:$0xff] %v207
      %232 = vst [vmem:[#allocation4 + $0x78] sm:$0xff] %v210
    $region17: #{tpu_custom_call.1} parent=1 // pred_fallthru
      _
    %v233 = vld [vmem:[%s2] sm:$0x1]
    %234 = vxpose.xlu0.b32.start [1/16] %v233, 128
    %235 = vxpose.xlu0.b32.cont [2/16] 0, 128
    %236 = vxpose.xlu0.b32.cont [3/16] 0, 128
    %237 = vxpose.xlu0.b32.cont [4/16] 0, 128
    %238 = vxpose.xlu0.b32.cont [5/16] 0, 128
    %239 = vxpose.xlu0.b32.cont [6/16] 0, 128
    %240 = vxpose.xlu0.b32.cont [7/16] 0, 128
    %241 = vxpose.xlu0.b32.cont [8/16] 0, 128
    %242 = vxpose.xlu0.b32.cont [9/16] 0, 128
    %243 = vxpose.xlu0.b32.cont [10/16] 0, 128
    %244 = vxpose.xlu0.b32.cont [11/16] 0, 128
    %245 = vxpose.xlu0.b32.cont [12/16] 0, 128
    %246 = vxpose.xlu0.b32.cont [13/16] 0, 128
    %247 = vxpose.xlu0.b32.cont [14/16] 0, 128
    %248 = vxpose.xlu0.b32.cont [15/16] 0, 128
    %249 = vxpose.xlu0.b32.end [16/16] 0, 128
    %v250 = vpop.trf.xlu0
    %v251 = vpop.trf.xlu0
    %v252 = vpop.trf.xlu0
    %v253 = vpop.trf.xlu0
    %v254 = vpop.trf.xlu0
    %v255 = vpop.trf.xlu0
    %v256 = vpop.trf.xlu0
    %v257 = vpop.trf.xlu0
    %v258 = vpop.trf.xlu0
    %v259 = vpop.trf.xlu0
    %v260 = vpop.trf.xlu0
    %v261 = vpop.trf.xlu0
    %v262 = vpop.trf.xlu0
    %v263 = vpop.trf.xlu0
    %v264 = vpop.trf.xlu0
    %v265 = vpop.trf.xlu0
    %266 = vmax.xlane.f32.xlu0 %v151
    %v267 = vpop.xlane.xlu0 %266
    %268 = vmax.xlane.f32.xlu0 %v154
    %v269 = vpop.xlane.xlu0 %268
    %270 = vmax.xlane.f32.xlu0 %v159
    %v271 = vpop.xlane.xlu0 %270
    %272 = vmax.xlane.f32.xlu0 %v162
    %v273 = vpop.xlane.xlu0 %272
    %274 = vmax.xlane.f32.xlu0 %v167
    %v275 = vpop.xlane.xlu0 %274
    %276 = vmax.xlane.f32.xlu0 %v170
    %v277 = vpop.xlane.xlu0 %276
    %278 = vmax.xlane.f32.xlu0 %v175
    %v279 = vpop.xlane.xlu0 %278
    %280 = vmax.xlane.f32.xlu0 %v178
    %v281 = vpop.xlane.xlu0 %280
    %282 = vmax.xlane.f32.xlu0 %v183
    %v283 = vpop.xlane.xlu0 %282
    %284 = vmax.xlane.f32.xlu0 %v186
    %v285 = vpop.xlane.xlu0 %284
    %286 = vmax.xlane.f32.xlu0 %v191
    %v287 = vpop.xlane.xlu0 %286
    %288 = vmax.xlane.f32.xlu0 %v194
    %v289 = vpop.xlane.xlu0 %288
    %290 = vmax.xlane.f32.xlu0 %v199
    %v291 = vpop.xlane.xlu0 %290
    %292 = vmax.xlane.f32.xlu0 %v202
    %v293 = vpop.xlane.xlu0 %292
    %294 = vmax.xlane.f32.xlu0 %v207
    %v295 = vpop.xlane.xlu0 %294
    %296 = vmax.xlane.f32.xlu0 %v210
    %v297 = vpop.xlane.xlu0 %296
    %v298 = vsub.f32 %v151, %v267
    %v299 = vsub.f32 %v154, %v269
    %v300 = vsub.f32 %v159, %v271
    %v301 = vsub.f32 %v162, %v273
    %v302 = vsub.f32 %v167, %v275
    %v303 = vsub.f32 %v170, %v277
    %v304 = vsub.f32 %v175, %v279
    %v305 = vsub.f32 %v178, %v281
    %v306 = vsub.f32 %v183, %v283
    %v307 = vsub.f32 %v186, %v285
    %v308 = vsub.f32 %v191, %v287
    %v309 = vsub.f32 %v194, %v289
    %v310 = vsub.f32 %v199, %v291
    %v311 = vsub.f32 %v202, %v293
    %v312 = vsub.f32 %v207, %v295
    %v313 = vsub.f32 %v210, %v297
    %v314 = vmul.f32 %v298, 1.442695
    %v315 = vpow.pop %v314
    %v316 = vmul.f32 %v299, 1.442695
    %v317 = vpow.pop %v316
    %v318 = vmul.f32 %v300, 1.442695
    %v319 = vpow.pop %v318
    %v320 = vmul.f32 %v301, 1.442695
    %v321 = vpow.pop %v320
    %v322 = vmul.f32 %v302, 1.442695
    %v323 = vpow.pop %v322
    %v324 = vmul.f32 %v303, 1.442695
    %v325 = vpow.pop %v324
    %v326 = vmul.f32 %v304, 1.442695
    %v327 = vpow.pop %v326
    %v328 = vmul.f32 %v305, 1.442695
    %v329 = vpow.pop %v328
    %v330 = vmul.f32 %v306, 1.442695
    %v331 = vpow.pop %v330
    %v332 = vmul.f32 %v307, 1.442695
    %v333 = vpow.pop %v332
    %v334 = vmul.f32 %v308, 1.442695
    %v335 = vpow.pop %v334
    %v336 = vmul.f32 %v309, 1.442695
    %v337 = vpow.pop %v336
    %v338 = vmul.f32 %v310, 1.442695
    %v339 = vpow.pop %v338
    %v340 = vmul.f32 %v311, 1.442695
    %v341 = vpow.pop %v340
    %v342 = vmul.f32 %v312, 1.442695
    %v343 = vpow.pop %v342
    %v344 = vmul.f32 %v313, 1.442695
    %v345 = vpow.pop %v344
    %346 = vadd.xlane.f32.xlu0 %v315
    %v347 = vpop.xlane.xlu0 %346
    %348 = vadd.xlane.f32.xlu0 %v317
    %v349 = vpop.xlane.xlu0 %348
    %350 = vadd.xlane.f32.xlu0 %v319
    %v351 = vpop.xlane.xlu0 %350
    %352 = vadd.xlane.f32.xlu0 %v321
    %v353 = vpop.xlane.xlu0 %352
    %354 = vadd.xlane.f32.xlu0 %v323
    %v355 = vpop.xlane.xlu0 %354
    %356 = vadd.xlane.f32.xlu0 %v325
    %v357 = vpop.xlane.xlu0 %356
    %358 = vadd.xlane.f32.xlu0 %v327
    %v359 = vpop.xlane.xlu0 %358
    %360 = vadd.xlane.f32.xlu0 %v329
    %v361 = vpop.xlane.xlu0 %360
    %362 = vadd.xlane.f32.xlu0 %v331
    %v363 = vpop.xlane.xlu0 %362
    %364 = vadd.xlane.f32.xlu0 %v333
    %v365 = vpop.xlane.xlu0 %364
    %366 = vadd.xlane.f32.xlu0 %v335
    %v367 = vpop.xlane.xlu0 %366
    %368 = vadd.xlane.f32.xlu0 %v337
    %v369 = vpop.xlane.xlu0 %368
    %370 = vadd.xlane.f32.xlu0 %v339
    %v371 = vpop.xlane.xlu0 %370
    %372 = vadd.xlane.f32.xlu0 %v341
    %v373 = vpop.xlane.xlu0 %372
    %374 = vadd.xlane.f32.xlu0 %v343
    %v375 = vpop.xlane.xlu0 %374
    %376 = vadd.xlane.f32.xlu0 %v345
    %v377 = vpop.xlane.xlu0 %376
    %v378 = vlaneseq
    %v379 = vand.u32 %v378, 127
    %380 = vset.pattern.permute.xlu0 0
    %381 = vperm.xlu0 %380, %v250
    %v382 = vpop.permute.xlu0 %381
    %383 = vset.pattern.permute.xlu0 0
    %384 = vperm.xlu0 %383, %v251
    %v385 = vpop.permute.xlu0 %384
    %386 = vset.pattern.permute.xlu0 0
    %387 = vperm.xlu0 %386, %v252
    %v388 = vpop.permute.xlu0 %387
    %389 = vset.pattern.permute.xlu0 0
    %390 = vperm.xlu0 %389, %v253
    %v391 = vpop.permute.xlu0 %390
    %392 = vset.pattern.permute.xlu0 0
    %393 = vperm.xlu0 %392, %v254
    %v394 = vpop.permute.xlu0 %393
    %395 = vset.pattern.permute.xlu0 0
    %396 = vperm.xlu0 %395, %v255
    %v397 = vpop.permute.xlu0 %396
    %398 = vset.pattern.permute.xlu0 0
    %399 = vperm.xlu0 %398, %v256
    %v400 = vpop.permute.xlu0 %399
    %401 = vset.pattern.permute.xlu0 0
    %402 = vperm.xlu0 %401, %v257
    %v403 = vpop.permute.xlu0 %402
    %404 = vset.pattern.permute.xlu0 0
    %405 = vperm.xlu0 %404, %v258
    %v406 = vpop.permute.xlu0 %405
    %407 = vset.pattern.permute.xlu0 0
    %408 = vperm.xlu0 %407, %v259
    %v409 = vpop.permute.xlu0 %408
    %410 = vset.pattern.permute.xlu0 0
    %411 = vperm.xlu0 %410, %v260
    %v412 = vpop.permute.xlu0 %411
    %413 = vset.pattern.permute.xlu0 0
    %414 = vperm.xlu0 %413, %v261
    %v415 = vpop.permute.xlu0 %414
    %416 = vset.pattern.permute.xlu0 0
    %417 = vperm.xlu0 %416, %v262
    %v418 = vpop.permute.xlu0 %417
    %419 = vset.pattern.permute.xlu0 0
    %420 = vperm.xlu0 %419, %v263
    %v421 = vpop.permute.xlu0 %420
    %422 = vset.pattern.permute.xlu0 0
    %423 = vperm.xlu0 %422, %v264
    %v424 = vpop.permute.xlu0 %423
    %425 = vset.pattern.permute.xlu0 0
    %426 = vperm.xlu0 %425, %v265
    %v427 = vpop.permute.xlu0 %426
    %vm428 = vcmp.eq.s32.totalorder %v379, %v382
    %vm429 = vcmp.eq.s32.totalorder %v379, %v385
    %vm430 = vcmp.eq.s32.totalorder %v379, %v388
    %vm431 = vcmp.eq.s32.totalorder %v379, %v391
    %vm432 = vcmp.eq.s32.totalorder %v379, %v394
    %vm433 = vcmp.eq.s32.totalorder %v379, %v397
    %vm434 = vcmp.eq.s32.totalorder %v379, %v400
    %vm435 = vcmp.eq.s32.totalorder %v379, %v403
    %vm436 = vcmp.eq.s32.totalorder %v379, %v406
    %vm437 = vcmp.eq.s32.totalorder %v379, %v409
    %vm438 = vcmp.eq.s32.totalorder %v379, %v412
    %vm439 = vcmp.eq.s32.totalorder %v379, %v415
    %vm440 = vcmp.eq.s32.totalorder %v379, %v418
    %vm441 = vcmp.eq.s32.totalorder %v379, %v421
    %vm442 = vcmp.eq.s32.totalorder %v379, %v424
    %vm443 = vcmp.eq.s32.totalorder %v379, %v427
    %v444 = vsel %vm428, %v151, 0.0
    %v445 = vsel %vm429, %v154, 0.0
    %v446 = vsel %vm430, %v159, 0.0
    %v447 = vsel %vm431, %v162, 0.0
    %v448 = vsel %vm432, %v167, 0.0
    %v449 = vsel %vm433, %v170, 0.0
    %v450 = vsel %vm434, %v175, 0.0
    %v451 = vsel %vm435, %v178, 0.0
    %v452 = vsel %vm436, %v183, 0.0
    %v453 = vsel %vm437, %v186, 0.0
    %v454 = vsel %vm438, %v191, 0.0
    %v455 = vsel %vm439, %v194, 0.0
    %v456 = vsel %vm440, %v199, 0.0
    %v457 = vsel %vm441, %v202, 0.0
    %v458 = vsel %vm442, %v207, 0.0
    %v459 = vsel %vm443, %v210, 0.0
    %460 = vadd.xlane.f32.xlu0 %v444
    %v461 = vpop.xlane.xlu0 %460
    %462 = vadd.xlane.f32.xlu0 %v445
    %v463 = vpop.xlane.xlu0 %462
    %464 = vadd.xlane.f32.xlu0 %v446
    %v465 = vpop.xlane.xlu0 %464
    %466 = vadd.xlane.f32.xlu0 %v447
    %v467 = vpop.xlane.xlu0 %466
    %468 = vadd.xlane.f32.xlu0 %v448
    %v469 = vpop.xlane.xlu0 %468
    %470 = vadd.xlane.f32.xlu0 %v449
    %v471 = vpop.xlane.xlu0 %470
    %472 = vadd.xlane.f32.xlu0 %v450
    %v473 = vpop.xlane.xlu0 %472
    %474 = vadd.xlane.f32.xlu0 %v451
    %v475 = vpop.xlane.xlu0 %474
    %476 = vadd.xlane.f32.xlu0 %v452
    %v477 = vpop.xlane.xlu0 %476
    %478 = vadd.xlane.f32.xlu0 %v453
    %v479 = vpop.xlane.xlu0 %478
    %480 = vadd.xlane.f32.xlu0 %v454
    %v481 = vpop.xlane.xlu0 %480
    %482 = vadd.xlane.f32.xlu0 %v455
    %v483 = vpop.xlane.xlu0 %482
    %484 = vadd.xlane.f32.xlu0 %v456
    %v485 = vpop.xlane.xlu0 %484
    %486 = vadd.xlane.f32.xlu0 %v457
    %v487 = vpop.xlane.xlu0 %486
    %488 = vadd.xlane.f32.xlu0 %v458
    %v489 = vpop.xlane.xlu0 %488
    %490 = vadd.xlane.f32.xlu0 %v459
    %v491 = vpop.xlane.xlu0 %490
    %v492 = vsub.f32 %v461, %v267
    %v493 = vsub.f32 %v463, %v269
    %v494 = vsub.f32 %v465, %v271
    %v495 = vsub.f32 %v467, %v273
    %v496 = vsub.f32 %v469, %v275
    %v497 = vsub.f32 %v471, %v277
    %v498 = vsub.f32 %v473, %v279
    %v499 = vsub.f32 %v475, %v281
    %v500 = vsub.f32 %v477, %v283
    %v501 = vsub.f32 %v479, %v285
    %v502 = vsub.f32 %v481, %v287
    %v503 = vsub.f32 %v483, %v289
    %v504 = vsub.f32 %v485, %v291
    %v505 = vsub.f32 %v487, %v293
    %v506 = vsub.f32 %v489, %v295
    %v507 = vsub.f32 %v491, %v297
    %v508 = vlog2.pop %v347
    %v509 = vmul.f32 %v508, 0.6931472
    %v510 = vlog2.pop %v349
    %v511 = vmul.f32 %v510, 0.6931472
    %v512 = vlog2.pop %v351
    %v513 = vmul.f32 %v512, 0.6931472
    %v514 = vlog2.pop %v353
    %v515 = vmul.f32 %v514, 0.6931472
    %v516 = vlog2.pop %v355
    %v517 = vmul.f32 %v516, 0.6931472
    %v518 = vlog2.pop %v357
    %v519 = vmul.f32 %v518, 0.6931472
    %v520 = vlog2.pop %v359
    %v521 = vmul.f32 %v520, 0.6931472
    %v522 = vlog2.pop %v361
    %v523 = vmul.f32 %v522, 0.6931472
    %v524 = vlog2.pop %v363
    %v525 = vmul.f32 %v524, 0.6931472
    %v526 = vlog2.pop %v365
    %v527 = vmul.f32 %v526, 0.6931472
    %v528 = vlog2.pop %v367
    %v529 = vmul.f32 %v528, 0.6931472
    %v530 = vlog2.pop %v369
    %v531 = vmul.f32 %v530, 0.6931472
    %v532 = vlog2.pop %v371
    %v533 = vmul.f32 %v532, 0.6931472
    %v534 = vlog2.pop %v373
    %v535 = vmul.f32 %v534, 0.6931472
    %v536 = vlog2.pop %v375
    %v537 = vmul.f32 %v536, 0.6931472
    %v538 = vlog2.pop %v377
    %v539 = vmul.f32 %v538, 0.6931472
    %v540 = vsub.f32 %v492, %v509
    %v541 = vsub.f32 %v493, %v511
    %v542 = vsub.f32 %v494, %v513
    %v543 = vsub.f32 %v495, %v515
    %v544 = vsub.f32 %v496, %v517
    %v545 = vsub.f32 %v497, %v519
    %v546 = vsub.f32 %v498, %v521
    %v547 = vsub.f32 %v499, %v523
    %v548 = vsub.f32 %v500, %v525
    %v549 = vsub.f32 %v501, %v527
    %v550 = vsub.f32 %v502, %v529
    %v551 = vsub.f32 %v503, %v531
    %v552 = vsub.f32 %v504, %v533
    %v553 = vsub.f32 %v505, %v535
    %v554 = vsub.f32 %v506, %v537
    %v555 = vsub.f32 %v507, %v539
    %556 = vxpose.xlu0.b32.start [1/16] %v540, 128
    %557 = vxpose.xlu0.b32.cont [2/16] %v541, 128
    %558 = vxpose.xlu0.b32.cont [3/16] %v542, 128
    %559 = vxpose.xlu0.b32.cont [4/16] %v543, 128
    %560 = vxpose.xlu0.b32.cont [5/16] %v544, 128
    %561 = vxpose.xlu0.b32.cont [6/16] %v545, 128
    %562 = vxpose.xlu0.b32.cont [7/16] %v546, 128
    %563 = vxpose.xlu0.b32.cont [8/16] %v547, 128
    %564 = vxpose.xlu0.b32.cont [9/16] %v548, 128
    %565 = vxpose.xlu0.b32.cont [10/16] %v549, 128
    %566 = vxpose.xlu0.b32.cont [11/16] %v550, 128
    %567 = vxpose.xlu0.b32.cont [12/16] %v551, 128
    %568 = vxpose.xlu0.b32.cont [13/16] %v552, 128
    %569 = vxpose.xlu0.b32.cont [14/16] %v553, 128
    %570 = vxpose.xlu0.b32.cont [15/16] %v554, 128
    %571 = vxpose.xlu0.b32.end [16/16] %v555, 128
    %v572 = vpop.trf.xlu0
    %v573 = vpop.trf.xlu0
    %v574 = vpop.trf.xlu0
    %v575 = vpop.trf.xlu0
    %v576 = vpop.trf.xlu0
    %v577 = vpop.trf.xlu0
    %v578 = vpop.trf.xlu0
    %v579 = vpop.trf.xlu0
    %v580 = vpop.trf.xlu0
    %v581 = vpop.trf.xlu0
    %v582 = vpop.trf.xlu0
    %v583 = vpop.trf.xlu0
    %v584 = vpop.trf.xlu0
    %v585 = vpop.trf.xlu0
    %v586 = vpop.trf.xlu0
    %v587 = vpop.trf.xlu0
    %588 = vst [vmem:[#allocation2] sm:$0x1] %v572
    // Predicated region
    $region18: #{tpu_custom_call.1} parent=1 // pred_check
      _
    $region19: #{tpu_custom_call.1} parent=1 // pred_check_branch
      %590 = sbr.rel (0) target = $region21
    $region20: #{tpu_custom_call.1} parent=1 // pred_region
      %s592 = ssub.s32 16, 16
      %593 = vsyncadd [#allocation3], %s592
      %s595 = sshll.u32 [#allocation2], 4
      %s596 = int_to_ptr.vmem [resolvable:$true] %s595
      %598 = dma.vmem_to_hbm [thread:$0]  %s596, 16, %s3, [#allocation3]
    $region21: #{tpu_custom_call.1} parent=1 // pred_fallthru
      _
    // Predicated region
    $region22: #{tpu_custom_call.1} parent=1 // pred_check
      _
    $region23: #{tpu_custom_call.1} parent=1 // pred_check_branch
      %600 = sbr.rel (0) target = $region25
    $region24: #{tpu_custom_call.1} parent=1 // pred_region
      %s602 = ssub.s32 2048, 2048
      %603 = vsyncadd [#allocation5], %s602
      %s604 = sshll.u32 [#allocation4], 4
      %s605 = int_to_ptr.vmem [resolvable:$true] %s604
      %610 = dma.vmem_to_hbm [thread:$0]  %s605, 2048, %s4, [#allocation5], 128, 128, 8
    $region25: #{tpu_custom_call.1} parent=1 // pred_fallthru
      _
    // Predicated region
    $region26: #{tpu_custom_call.1} parent=1 // pred_check
      _
    $region27: #{tpu_custom_call.1} parent=1 // pred_check_branch
      %612 = sbr.rel (0) target = $region29
    $region28: #{tpu_custom_call.1} parent=1 // pred_region
      %613 = dma.done [#allocation3], 16
    $region29: #{tpu_custom_call.1} parent=1 // pred_fallthru
      _
    // Predicated region
    $region30: #{tpu_custom_call.1} parent=1 // pred_check
      _
    $region31: #{tpu_custom_call.1} parent=1 // pred_check_branch
      %615 = sbr.rel (0) target = $region33
    $region32: #{tpu_custom_call.1} parent=1 // pred_region
      %616 = dma.done [#allocation5], 2048
    $region33: #{tpu_custom_call.1} parent=1 // pred_fallthru
      _
    %617 = vsyncpa [#allocation3], 1
    %618 = vsyncpa [#allocation5], 1

</llo_original>
